<compile_context>
chip_gen: v6e
topology: v6e:2x2x1
jax: 0.10.0
libtpu: 0.0.40
codegen_flags: <defaults>
</compile_context>

<pallas_src>
import functools

import jax
import jax.numpy as jnp
from jax.experimental import pallas as pl
from jax.experimental.pallas import tpu as pltpu

LANE = 128      # lane width (last dim)
SUBLANE = 8     # f32 sublane rows (second-to-last dim)
MXU_M = 256     # MXU M dimension on v6e/v7x (2x128 on v5e)


def _round_up(x, m):
    return (x + m - 1) // m * m


def _tpu_info():
    """(vmem_capacity_bytes, two_tensorcores, bf16_vpu) for the local chip."""
    kind = ""
    try:
        kind = jax.devices()[0].device_kind.lower()
    except Exception:
        pass
    two_cores = ("v7" in kind) or ("7x" in kind)          # v7x: 2 TCs / chip
    # v5e and older have no bf16 VALU path; v6e/v7x do.
    bf16_vpu = not any(t in kind for t in ("v5", "v4", "v3", "v2"))
    try:
        vmem_cap = int(pltpu.get_tpu_info().vmem_capacity_bytes)
    except Exception:
        vmem_cap = (64 << 20) if two_cores else (128 << 20)
    return vmem_cap, two_cores, bf16_vpu


def _choose_batch_tiling(b_rows, two_cores):
    """Pick (tile_m, padded_rows) so row tiles fill the MXU in M and the grid
    only splits when it buys real parallelism (v7x) or the batch is large."""
    b_pad = _round_up(max(b_rows, SUBLANE), SUBLANE)
    target = 2 * MXU_M                       # 512-row tiles when batch allows
    steps = max(1, pl.cdiv(b_pad, target))
    if two_cores and b_pad >= 2 * MXU_M:
        steps = max(steps, 2)                # both v7x TCs get >=256-row tiles
    tile_m = _round_up(pl.cdiv(b_pad, steps), SUBLANE)
    return tile_m, steps * tile_m


def _vmem_budget_bytes(vmem_cap):
    # ~96 MiB on v5e/v6e (128 MiB physical), ~48 MiB on v7x (64 MiB physical).
    return int(vmem_cap) * 3 // 4


# ---------------------------------------------------------------------------
# Kernels
# ---------------------------------------------------------------------------
def mlp_kernel(x_ref, w1_ref, b1_ref, w2_ref, b2_ref,
               w3_ref, b3_ref, w4_ref, b4_ref, o_ref, *, bf16_eltwise):
    """Fused 4-layer MLP on one row tile. Matmul operands bf16, f32 accum."""
    def bias_relu(h, b_ref):
        if bf16_eltwise:
            # v6e/v7x: bf16 VPU path halves vreg pressure of (tile_m, H) tiles.
            return jnp.maximum(h.astype(jnp.bfloat16)
                               + b_ref[...].astype(jnp.bfloat16), 0.0)
        # v5e: keep elementwise in f32 (no bf16 VALU), cast for the next dot.
        return jnp.maximum(h + b_ref[...], 0.0).astype(jnp.bfloat16)

    h = bias_relu(jnp.dot(x_ref[...], w1_ref[...],
                          preferred_element_type=jnp.float32), b1_ref)
    h = bias_relu(jnp.dot(h, w2_ref[...],
                          preferred_element_type=jnp.float32), b2_ref)
    h = bias_relu(jnp.dot(h, w3_ref[...],
                          preferred_element_type=jnp.float32), b3_ref)
    h = jnp.dot(h, w4_ref[...], preferred_element_type=jnp.float32) + b4_ref[...]
    o_ref[...] = h.astype(o_ref.dtype)


def linear_kernel(x_ref, w_ref, b_ref, o_ref, *, relu, bf16_eltwise):
    """Single Linear (+ optional ReLU) layer on one row tile (fallback path)."""
    h = jnp.dot(x_ref[...], w_ref[...], preferred_element_type=jnp.float32)
    if relu:
        if bf16_eltwise:
            h = jnp.maximum(h.astype(jnp.bfloat16)
                            + b_ref[...].astype(jnp.bfloat16), 0.0)
        else:
            h = jnp.maximum(h + b_ref[...], 0.0)
    else:
        h = h + b_ref[...]
    o_ref[...] = h.astype(o_ref.dtype)


# ---------------------------------------------------------------------------
# Parameter init / prep (matches the PyTorch module)
# ---------------------------------------------------------------------------
def init_params(key, input_dim, output_dim, hidden_dim):
    """Kaiming-normal (relu) weights, zero biases, matching the PyTorch init.

    PyTorch kaiming_normal_ on Linear.weight (out, in) uses std=sqrt(2/fan_in).
    Sample (out, in) then transpose to (in, out) so the kernel computes
    x @ W + b directly.
    """
    ks = jax.random.split(key, 4)
    dims = [(input_dim, hidden_dim), (hidden_dim, hidden_dim),
            (hidden_dim, hidden_dim), (hidden_dim, output_dim)]
    params = {}
    for idx, (k, (fan_in, fan_out)) in enumerate(zip(ks, dims), start=1):
        std = (2.0 / fan_in) ** 0.5
        w = jax.random.normal(k, (fan_out, fan_in), dtype=jnp.float32) * std
        params[f"w{idx}"] = w.T                                   # (in, out)
        params[f"b{idx}"] = jnp.zeros((1, fan_out), jnp.float32)  # zero bias
    return params


def prepare_params(params):
    """One-time prep: pad layer-1 K and layer-4 N to 128-lane multiples and
    cast weights to bf16 (biases stay f32; cast in-kernel where profitable)."""
    d_in, h = params["w1"].shape
    d_out = params["w4"].shape[1]
    d_in_pad = _round_up(d_in, LANE)
    d_out_pad = _round_up(d_out, LANE)

    w1 = jnp.zeros((d_in_pad, h), jnp.bfloat16).at[:d_in, :].set(
        params["w1"].astype(jnp.bfloat16))
    w4 = jnp.zeros((h, d_out_pad), jnp.bfloat16).at[:, :d_out].set(
        params["w4"].astype(jnp.bfloat16))
    b4 = jnp.zeros((1, d_out_pad), jnp.float32).at[:, :d_out].set(
        params["b4"].astype(jnp.float32))

    padded = {
        "w1": w1,
        "b1": params["b1"].astype(jnp.float32),
        "w2": params["w2"].astype(jnp.bfloat16),
        "b2": params["b2"].astype(jnp.float32),
        "w3": params["w3"].astype(jnp.bfloat16),
        "b3": params["b3"].astype(jnp.float32),
        "w4": w4,
        "b4": b4,
    }
    meta = {"d_in": d_in, "d_in_pad": d_in_pad,
            "d_out": d_out, "d_out_pad": d_out_pad, "hidden": h}
    return padded, meta


# ---------------------------------------------------------------------------
# Forward paths
# ---------------------------------------------------------------------------
def _fused_vmem_needed(p, tile_m, d_in_pad, d_out_pad, hidden):
    weight_bytes = sum(int(v.size) * v.dtype.itemsize for v in p.values())  # x1 (Buffered(1))
    act_bytes = 2 * tile_m * d_in_pad * 2 + 2 * tile_m * d_out_pad * 4      # dbl-buffered I/O
    live_bytes = 4 * tile_m * hidden * 4                                    # intermediates slack
    return (weight_bytes + act_bytes + live_bytes) * 5 // 4                 # +25% headroom


def _fused_forward(xp, p, tile_m, d_in_pad, d_out_pad, hidden, bf16_vpu, vmem_limit):
    b_pad = xp.shape[0]
    grid = (b_pad // tile_m,)
    row = lambda i: (i, 0)
    full = lambda i: (0, 0)
    resident = dict(index_map=full, pipeline_mode=pl.Buffered(1))

    in_specs = [
        pl.BlockSpec((tile_m, d_in_pad), row),
        pl.BlockSpec((d_in_pad, hidden), **resident),     # w1
        pl.BlockSpec((1, hidden), **resident),            # b1
        pl.BlockSpec((hidden, hidden), **resident),       # w2
        pl.BlockSpec((1, hidden), **resident),            # b2
        pl.BlockSpec((hidden, hidden), **resident),       # w3
        pl.BlockSpec((1, hidden), **resident),            # b3
        pl.BlockSpec((hidden, d_out_pad), **resident),    # w4
        pl.BlockSpec((1, d_out_pad), **resident),         # b4
    ]

    flops = int(2 * b_pad * (d_in_pad * hidden + 2 * hidden * hidden
                             + hidden * d_out_pad))
    weight_bytes = sum(int(v.size) * v.dtype.itemsize for v in p.values())
    bytes_accessed = int(xp.size * 2 + weight_bytes + b_pad * d_out_pad * 4)

    kernel = functools.partial(mlp_kernel, bf16_eltwise=bf16_vpu)
    return pl.pallas_call(
        kernel,
        out_shape=jax.ShapeDtypeStruct((b_pad, d_out_pad), jnp.float32),
        grid_spec=pltpu.PrefetchScalarGridSpec(
            num_scalar_prefetch=0,
            grid=grid,
            in_specs=in_specs,
            out_specs=pl.BlockSpec((tile_m, d_out_pad), row),
        ),
        compiler_params=pltpu.CompilerParams(
            dimension_semantics=("parallel",),
            vmem_limit_bytes=int(vmem_limit)),
        cost_estimate=pl.CostEstimate(
            flops=flops, transcendentals=0, bytes_accessed=bytes_accessed),
    )(xp, p["w1"], p["b1"], p["w2"], p["b2"],
      p["w3"], p["b3"], p["w4"], p["b4"])


def _linear_layer(x, w, b, *, relu, tile_m, bf16_vpu, vmem_budget, out_dtype):
    b_rows, k = x.shape
    n = w.shape[1]
    grid = (b_rows // tile_m,)
    needed = (int(w.size) * w.dtype.itemsize + int(b.size) * 4
              + 2 * tile_m * k * x.dtype.itemsize
              + 2 * tile_m * n * jnp.dtype(out_dtype).itemsize
              + 2 * tile_m * n * 4) * 5 // 4
    # TODO(synk): if a single layer's weights exceed the VMEM budget (very
    # large hidden dims on v7x), add a K/N reduction grid axis for that layer.
    vmem_limit = min(max(int(needed), 16 << 20), int(vmem_budget))

    row = lambda i: (i, 0)
    full = lambda i: (0, 0)
    kernel = functools.partial(linear_kernel, relu=relu, bf16_eltwise=bf16_vpu)
    return pl.pallas_call(
        kernel,
        out_shape=jax.ShapeDtypeStruct((b_rows, n), out_dtype),
        grid_spec=pltpu.PrefetchScalarGridSpec(
            num_scalar_prefetch=0,
            grid=grid,
            in_specs=[pl.BlockSpec((tile_m, k), row),
                      pl.BlockSpec((k, n), full, pipeline_mode=pl.Buffered(1)),
                      pl.BlockSpec((1, n), full, pipeline_mode=pl.Buffered(1))],
            out_specs=pl.BlockSpec((tile_m, n), row),
        ),
        compiler_params=pltpu.CompilerParams(
            dimension_semantics=("parallel",),
            vmem_limit_bytes=vmem_limit),
    )(x, w, b)


def _layerwise_forward(xp, p, tile_m, bf16_vpu, vmem_budget):
    h = xp
    for i in (1, 2, 3):
        h = _linear_layer(h, p[f"w{i}"], p[f"b{i}"], relu=True, tile_m=tile_m,
                          bf16_vpu=bf16_vpu, vmem_budget=vmem_budget,
                          out_dtype=jnp.bfloat16)
    return _linear_layer(h, p["w4"], p["b4"], relu=False, tile_m=tile_m,
                         bf16_vpu=bf16_vpu, vmem_budget=vmem_budget,
                         out_dtype=jnp.float32)


def simple_dnn_forward(x, padded_params, meta, *, tile_m=None,
                       force_layerwise=False):
    """x: (B, input_dim) f32. Returns (B, output_dim) f32."""
    B, d_in = x.shape
    assert d_in == meta["d_in"]
    d_in_pad = meta["d_in_pad"]
    d_out = meta["d_out"]
    d_out_pad = meta["d_out_pad"]
    hidden = meta["hidden"]
    p = padded_params

    vmem_cap, two_cores, bf16_vpu = _tpu_info()
    if tile_m is None:
        tile_m, b_pad = _choose_batch_tiling(B, two_cores)
    else:
        b_pad = _round_up(_round_up(B, SUBLANE), tile_m)

    # Cast activations to bf16 (halves input DMA, native MXU rate); only pad
    # the dims that actually need it (avoids a full extra HBM pass otherwise).
    xp = x.astype(jnp.bfloat16)
    if b_pad != B or d_in_pad != d_in:
        xp = jnp.pad(xp, ((0, b_pad - B), (0, d_in_pad - d_in)))

    vmem_budget = _vmem_budget_bytes(vmem_cap)
    needed = _fused_vmem_needed(p, tile_m, d_in_pad, d_out_pad, hidden)

    if force_layerwise or needed > vmem_budget:
        # Fused weight set does not fit this chip's VMEM (or fallback forced):
        # run one pallas_call per layer, each with only its weights resident.
        out = _layerwise_forward(xp, p, tile_m, bf16_vpu, vmem_budget)
    else:
        vmem_limit = min(max(needed, 16 << 20), vmem_budget)
        out = _fused_forward(xp, p, tile_m, d_in_pad, d_out_pad, hidden,
                             bf16_vpu, vmem_limit)
    return out[:B, :d_out]


if __name__ == "__main__":
    # Small, deterministic demo shapes (hidden_dim is a module hyper-parameter;
    # kept modest here so the script is quick).
    batch = 16
    input_dim = 32
    hidden_dim = 256
    output_dim = 32

    key = jax.random.PRNGKey(0)
    k_x, k_p, k_x2 = jax.random.split(key, 3)
    x = jax.random.normal(k_x, (batch, input_dim), dtype=jnp.float32)
    params = init_params(k_p, input_dim, output_dim, hidden_dim)
    padded_params, meta = prepare_params(params)

    # Pure-JAX reference using the same bf16-operand / f32-accumulate recipe.
    def ref_forward(xi):
        h = xi
        for i in range(1, 4):
            h = jnp.dot(h.astype(jnp.bfloat16),
                        params[f"w{i}"].astype(jnp.bfloat16),
                        preferred_element_type=jnp.float32) + params[f"b{i}"]
            h = jnp.maximum(h, 0.0)
        return jnp.dot(h.astype(jnp.bfloat16),
                       params["w4"].astype(jnp.bfloat16),
                       preferred_element_type=jnp.float32) + params["b4"]

    # 1) Fused path, single grid step (small batch, no forced split).
    out = simple_dnn_forward(x, padded_params, meta)
    jax.block_until_ready(out)
    ref = ref_forward(x)
    assert out.shape == (batch, output_dim)
    assert jnp.allclose(out, ref, atol=2e-2, rtol=2e-2), float(
        jnp.max(jnp.abs(out - ref)))

    # 2) Fused path with a multi-step grid (exercises batch padding + tiling).
    x2 = jax.random.normal(k_x2, (520, input_dim), dtype=jnp.float32)
    out2 = simple_dnn_forward(x2, padded_params, meta)
    jax.block_until_ready(out2)
    ref2 = ref_forward(x2)
    assert out2.shape == (520, output_dim)
    assert jnp.allclose(out2, ref2, atol=2e-2, rtol=2e-2), float(
        jnp.max(jnp.abs(out2 - ref2)))

    # 3) Per-layer fallback (used automatically when the fused weight set
    #    would overflow the chip's VMEM budget, e.g. huge hidden dims on v7x).
    out3 = simple_dnn_forward(x, padded_params, meta, force_layerwise=True)
    jax.block_until_ready(out3)
    assert jnp.allclose(out3, ref, atol=2e-2, rtol=2e-2), float(
        jnp.max(jnp.abs(out3 - ref)))

    print("KERNEL_OK")
</pallas_src>

<mosaic_0001>
module attributes {stable_mosaic.version = 11 : i64} {
  func.func @mlp_kernel(%arg0: i32, %arg1: memref<16x128xbf16, #tpu.memory_space<vmem>>, %arg2: memref<128x256xbf16, #tpu.memory_space<vmem>>, %arg3: memref<1x256xf32, #tpu.memory_space<vmem>>, %arg4: memref<256x256xbf16, #tpu.memory_space<vmem>>, %arg5: memref<1x256xf32, #tpu.memory_space<vmem>>, %arg6: memref<256x256xbf16, #tpu.memory_space<vmem>>, %arg7: memref<1x256xf32, #tpu.memory_space<vmem>>, %arg8: memref<256x128xbf16, #tpu.memory_space<vmem>>, %arg9: memref<1x128xf32, #tpu.memory_space<vmem>>, %arg10: memref<16x128xf32, #tpu.memory_space<vmem>>) attributes {dimension_semantics = [#tpu.dimension_semantics<parallel>], iteration_bounds = array<i64: 1>, scalar_prefetch = 0 : i64, scratch_operands = 0 : i64, tpu.core_type = #tpu.core_type<tc>, window_params = [{transform_indices = @transform_0, window_bounds = array<i64: 16, 128>}, {pipeline_mode = #tpu.pipeline_mode<synchronous>, transform_indices = @transform_1, window_bounds = array<i64: 128, 256>}, {pipeline_mode = #tpu.pipeline_mode<synchronous>, transform_indices = @transform_2, window_bounds = array<i64: 1, 256>}, {pipeline_mode = #tpu.pipeline_mode<synchronous>, transform_indices = @transform_3, window_bounds = array<i64: 256, 256>}, {pipeline_mode = #tpu.pipeline_mode<synchronous>, transform_indices = @transform_4, window_bounds = array<i64: 1, 256>}, {pipeline_mode = #tpu.pipeline_mode<synchronous>, transform_indices = @transform_5, window_bounds = array<i64: 256, 256>}, {pipeline_mode = #tpu.pipeline_mode<synchronous>, transform_indices = @transform_6, window_bounds = array<i64: 1, 256>}, {pipeline_mode = #tpu.pipeline_mode<synchronous>, transform_indices = @transform_7, window_bounds = array<i64: 256, 128>}, {pipeline_mode = #tpu.pipeline_mode<synchronous>, transform_indices = @transform_8, window_bounds = array<i64: 1, 128>}, {transform_indices = @transform_9, window_bounds = array<i64: 16, 128>}]} {
    %c0 = arith.constant 0 : index
    %c0_0 = arith.constant 0 : index
    %0 = vector.load %arg1[%c0, %c0_0] : memref<16x128xbf16, #tpu.memory_space<vmem>>, vector<16x128xbf16>
    %c0_1 = arith.constant 0 : index
    %c0_2 = arith.constant 0 : index
    %1 = vector.load %arg2[%c0_1, %c0_2] : memref<128x256xbf16, #tpu.memory_space<vmem>>, vector<128x256xbf16>
    %cst = arith.constant dense<0.000000e+00> : vector<16x256xf32>
    %2 = tpu.matmul %0, %1, %cst {dimension_numbers = #tpu.dot_dimension_numbers<[1], [0], [0], [1], [0, 0, 1, 1], [], []>} : vector<16x128xbf16>, vector<128x256xbf16>, vector<16x256xf32> -> vector<16x256xf32>
    %3 = arith.truncf %2 : vector<16x256xf32> to vector<16x256xbf16>
    %c0_3 = arith.constant 0 : index
    %c0_4 = arith.constant 0 : index
    %4 = vector.load %arg3[%c0_3, %c0_4] : memref<1x256xf32, #tpu.memory_space<vmem>>, vector<1x256xf32>
    %5 = arith.truncf %4 : vector<1x256xf32> to vector<1x256xbf16>
    %6 = vector.broadcast %5 : vector<1x256xbf16> to vector<16x256xbf16>
    %7 = arith.addf %3, %6 : vector<16x256xbf16>
    %cst_5 = arith.constant 0.000000e+00 : bf16
    %8 = vector.broadcast %cst_5 : bf16 to vector<16x256xbf16>
    %9 = arith.maximumf %7, %8 : vector<16x256xbf16>
    %c0_6 = arith.constant 0 : index
    %c0_7 = arith.constant 0 : index
    %10 = vector.load %arg4[%c0_6, %c0_7] : memref<256x256xbf16, #tpu.memory_space<vmem>>, vector<256x256xbf16>
    %cst_8 = arith.constant dense<0.000000e+00> : vector<16x256xf32>
    %11 = tpu.matmul %9, %10, %cst_8 {dimension_numbers = #tpu.dot_dimension_numbers<[1], [0], [0], [1], [0, 0, 1, 1], [], []>} : vector<16x256xbf16>, vector<256x256xbf16>, vector<16x256xf32> -> vector<16x256xf32>
    %12 = arith.truncf %11 : vector<16x256xf32> to vector<16x256xbf16>
    %c0_9 = arith.constant 0 : index
    %c0_10 = arith.constant 0 : index
    %13 = vector.load %arg5[%c0_9, %c0_10] : memref<1x256xf32, #tpu.memory_space<vmem>>, vector<1x256xf32>
    %14 = arith.truncf %13 : vector<1x256xf32> to vector<1x256xbf16>
    %15 = vector.broadcast %14 : vector<1x256xbf16> to vector<16x256xbf16>
    %16 = arith.addf %12, %15 : vector<16x256xbf16>
    %cst_11 = arith.constant 0.000000e+00 : bf16
    %17 = vector.broadcast %cst_11 : bf16 to vector<16x256xbf16>
    %18 = arith.maximumf %16, %17 : vector<16x256xbf16>
    %c0_12 = arith.constant 0 : index
    %c0_13 = arith.constant 0 : index
    %19 = vector.load %arg6[%c0_12, %c0_13] : memref<256x256xbf16, #tpu.memory_space<vmem>>, vector<256x256xbf16>
    %cst_14 = arith.constant dense<0.000000e+00> : vector<16x256xf32>
    %20 = tpu.matmul %18, %19, %cst_14 {dimension_numbers = #tpu.dot_dimension_numbers<[1], [0], [0], [1], [0, 0, 1, 1], [], []>} : vector<16x256xbf16>, vector<256x256xbf16>, vector<16x256xf32> -> vector<16x256xf32>
    %21 = arith.truncf %20 : vector<16x256xf32> to vector<16x256xbf16>
    %c0_15 = arith.constant 0 : index
    %c0_16 = arith.constant 0 : index
    %22 = vector.load %arg7[%c0_15, %c0_16] : memref<1x256xf32, #tpu.memory_space<vmem>>, vector<1x256xf32>
    %23 = arith.truncf %22 : vector<1x256xf32> to vector<1x256xbf16>
    %24 = vector.broadcast %23 : vector<1x256xbf16> to vector<16x256xbf16>
    %25 = arith.addf %21, %24 : vector<16x256xbf16>
    %cst_17 = arith.constant 0.000000e+00 : bf16
    %26 = vector.broadcast %cst_17 : bf16 to vector<16x256xbf16>
    %27 = arith.maximumf %25, %26 : vector<16x256xbf16>
    %c0_18 = arith.constant 0 : index
    %c0_19 = arith.constant 0 : index
    %28 = vector.load %arg8[%c0_18, %c0_19] : memref<256x128xbf16, #tpu.memory_space<vmem>>, vector<256x128xbf16>
    %cst_20 = arith.constant dense<0.000000e+00> : vector<16x128xf32>
    %29 = tpu.matmul %27, %28, %cst_20 {dimension_numbers = #tpu.dot_dimension_numbers<[1], [0], [0], [1], [0, 0, 1, 1], [], []>} : vector<16x256xbf16>, vector<256x128xbf16>, vector<16x128xf32> -> vector<16x128xf32>
    %c0_21 = arith.constant 0 : index
    %c0_22 = arith.constant 0 : index
    %30 = vector.load %arg9[%c0_21, %c0_22] : memref<1x128xf32, #tpu.memory_space<vmem>>, vector<1x128xf32>
    %31 = vector.broadcast %30 : vector<1x128xf32> to vector<16x128xf32>
    %32 = arith.addf %29, %31 : vector<16x128xf32>
    %c0_23 = arith.constant 0 : index
    %c0_24 = arith.constant 0 : index
    %33 = vector.load %arg10[%c0_23, %c0_24] : memref<16x128xf32, #tpu.memory_space<vmem>>, vector<16x128xf32>
    tpu.vector_store %arg10[%c0_23, %c0_24], %32 {strides = array<i32>} : memref<16x128xf32, #tpu.memory_space<vmem>>, vector<16x128xf32>,
    return
  }
  func.func @transform_0(%arg0: i32) -> (i32, i32) {
    %c0_i32 = arith.constant 0 : i32
    %c0_i32_0 = arith.constant 0 : i32
    return %arg0, %c0_i32 : i32, i32
  }
  func.func @transform_1(%arg0: i32) -> (i32, i32) {
    %c0_i32 = arith.constant 0 : i32
    %c0_i32_0 = arith.constant 0 : i32
    %c0_i32_1 = arith.constant 0 : i32
    return %c0_i32, %c0_i32_0 : i32, i32
  }
  func.func @transform_2(%arg0: i32) -> (i32, i32) {
    %c0_i32 = arith.constant 0 : i32
    %c0_i32_0 = arith.constant 0 : i32
    %c0_i32_1 = arith.constant 0 : i32
    return %c0_i32, %c0_i32_0 : i32, i32
  }
  func.func @transform_3(%arg0: i32) -> (i32, i32) {
    %c0_i32 = arith.constant 0 : i32
    %c0_i32_0 = arith.constant 0 : i32
    %c0_i32_1 = arith.constant 0 : i32
    return %c0_i32, %c0_i32_0 : i32, i32
  }
  func.func @transform_4(%arg0: i32) -> (i32, i32) {
    %c0_i32 = arith.constant 0 : i32
    %c0_i32_0 = arith.constant 0 : i32
    %c0_i32_1 = arith.constant 0 : i32
    return %c0_i32, %c0_i32_0 : i32, i32
  }
  func.func @transform_5(%arg0: i32) -> (i32, i32) {
    %c0_i32 = arith.constant 0 : i32
    %c0_i32_0 = arith.constant 0 : i32
    %c0_i32_1 = arith.constant 0 : i32
    return %c0_i32, %c0_i32_0 : i32, i32
  }
  func.func @transform_6(%arg0: i32) -> (i32, i32) {
    %c0_i32 = arith.constant 0 : i32
    %c0_i32_0 = arith.constant 0 : i32
    %c0_i32_1 = arith.constant 0 : i32
    return %c0_i32, %c0_i32_0 : i32, i32
  }
  func.func @transform_7(%arg0: i32) -> (i32, i32) {
    %c0_i32 = arith.constant 0 : i32
    %c0_i32_0 = arith.constant 0 : i32
    %c0_i32_1 = arith.constant 0 : i32
    return %c0_i32, %c0_i32_0 : i32, i32
  }
  func.func @transform_8(%arg0: i32) -> (i32, i32) {
    %c0_i32 = arith.constant 0 : i32
    %c0_i32_0 = arith.constant 0 : i32
    %c0_i32_1 = arith.constant 0 : i32
    return %c0_i32, %c0_i32_0 : i32, i32
  }
  func.func @transform_9(%arg0: i32) -> (i32, i32) {
    %c0_i32 = arith.constant 0 : i32
    %c0_i32_0 = arith.constant 0 : i32
    return %arg0, %c0_i32 : i32, i32
  }
}

</mosaic_0001>

<llo_original>
// kernel: tpu_custom_call.1
$region0: #{tpu_custom_call.1}
  #allocation0 [shape = 'u32[]', space=smem, size = 0x4, offset = 0x4, fixed_abs, tag = 'smem constant byte address 0x4 - core index']
  #allocation1 [shape = 'u32[144,128]{1,0:T(1,128)}', space=vmem, size = 0x12000, scoped, tag = 'internal scratch']
  %s0 = inlined_call_operand.hbm [shape: bf16[16,128], index: 0, kind: input, shape index: {}]
  %s1 = inlined_call_operand.hbm [shape: bf16[128,256], index: 1, kind: input, shape index: {}]
  %s2 = inlined_call_operand.vmem [shape: f32[1,256], index: 2, kind: input, shape index: {}]
  %s3 = inlined_call_operand.hbm [shape: bf16[256,256], index: 3, kind: input, shape index: {}]
  %s4 = inlined_call_operand.vmem [shape: f32[1,256], index: 4, kind: input, shape index: {}]
  %s5 = inlined_call_operand.hbm [shape: bf16[256,256], index: 5, kind: input, shape index: {}]
  %s6 = inlined_call_operand.vmem [shape: f32[1,256], index: 6, kind: input, shape index: {}]
  %s7 = inlined_call_operand.hbm [shape: bf16[256,128], index: 7, kind: input, shape index: {}]
  %s8 = inlined_call_operand.vmem [shape: f32[1,128], index: 8, kind: input, shape index: {}]
  %s9 = inlined_call_operand.hbm [shape: f32[16,128], index: 9, kind: output, shape index: {}]
  %s10 = sld [smem:[#allocation0]]
  $region66: #{tpu_custom_call.1} parent=0
    _
  %s12 = ssub.s32 1, %s10
  %s13 = scalar_select 0, %s12, %s10
  $region1: #{tpu_custom_call.1} parent=0
    #allocation2 [shape = 'u8[4096]{0}', space=vmem, size = 0x1000, scoped, tag = 'input window, operand 0, single buffered']
    #allocation3 [shape = 's32[1]{0}', space=sflag, size = 0x4, scoped, tag = 'scoped memory for tpu_custom_call.1']
    #allocation4 [shape = 's32[1]{0}', space=sflag, size = 0x4, scoped, tag = 'scoped memory for tpu_custom_call.1']
    #allocation5 [shape = 'u8[65536]{0}', space=vmem, size = 0x10000, scoped, tag = 'input window, operand 1, single buffered']
    #allocation6 [shape = 's32[1]{0}', space=sflag, size = 0x4, scoped, tag = 'scoped memory for tpu_custom_call.1']
    #allocation7 [shape = 'u8[131072]{0}', space=vmem, size = 0x20000, scoped, tag = 'input window, operand 3, single buffered']
    #allocation8 [shape = 'u8[131072]{0}', space=vmem, size = 0x20000, scoped, tag = 'input window, operand 5, single buffered']
    #allocation9 [shape = 's32[1]{0}', space=sflag, size = 0x4, scoped, tag = 'scoped memory for tpu_custom_call.1']
    #allocation10 [shape = 'u8[65536]{0}', space=vmem, size = 0x10000, scoped, tag = 'input window, operand 7, single buffered']
    #allocation11 [shape = 'u8[8192]{0}', space=vmem, size = 0x2000, scoped, tag = 'output window, operand 0, single buffered']
    %14 = vsyncpa [#allocation3], 0
    %15 = vsyncpa [#allocation6], 0
    %16 = vsyncpa [#allocation9], 0
    %17 = vsyncpa [#allocation4], 0
    // Predicated region
    $region2: #{tpu_custom_call.1} parent=1 // pred_check
      _
    $region3: #{tpu_custom_call.1} parent=1 // pred_check_branch
      %19 = sbr.rel (0) target = $region5
    $region4: #{tpu_custom_call.1} parent=1 // pred_region
      %s21 = ssub.s32 128, 128
      %22 = vsyncadd [#allocation3], %s21
      %s23 = sshll.u32 [#allocation2], 4
      %s24 = int_to_ptr.vmem [resolvable:$true] %s23
      %29 = dma.hbm_to_vmem [thread:$0]  %s0, 128, %s24, [#allocation3], 64, 64, 4
    $region5: #{tpu_custom_call.1} parent=1 // pred_fallthru
      _
    // Predicated region
    $region6: #{tpu_custom_call.1} parent=1 // pred_check
      _
    $region7: #{tpu_custom_call.1} parent=1 // pred_check_branch
      %31 = sbr.rel (0) target = $region9
    $region8: #{tpu_custom_call.1} parent=1 // pred_region
      %s33 = ssub.s32 2048, 2048
      %34 = vsyncadd [#allocation6], %s33
      %s35 = sshll.u32 [#allocation5], 4
      %s36 = int_to_ptr.vmem [resolvable:$true] %s35
      %41 = dma.hbm_to_vmem [thread:$0]  %s1, 2048, %s36, [#allocation6], 128, 128, 8
    $region9: #{tpu_custom_call.1} parent=1 // pred_fallthru
      _
    // Predicated region
    $region10: #{tpu_custom_call.1} parent=1 // pred_check
      _
    $region11: #{tpu_custom_call.1} parent=1 // pred_check_branch
      %43 = sbr.rel (0) target = $region13
    $region12: #{tpu_custom_call.1} parent=1 // pred_region
      _
    $region13: #{tpu_custom_call.1} parent=1 // pred_fallthru
      _
    // Predicated region
    $region14: #{tpu_custom_call.1} parent=1 // pred_check
      _
    $region15: #{tpu_custom_call.1} parent=1 // pred_check_branch
      %45 = sbr.rel (0) target = $region17
    $region16: #{tpu_custom_call.1} parent=1 // pred_region
      %s47 = ssub.s32 4096, 4096
      %48 = vsyncadd [#allocation6], %s47
      %s49 = sshll.u32 [#allocation7], 4
      %s50 = int_to_ptr.vmem [resolvable:$true] %s49
      %55 = dma.hbm_to_vmem [thread:$0]  %s3, 4096, %s50, [#allocation6], 128, 128, 8
    $region17: #{tpu_custom_call.1} parent=1 // pred_fallthru
      _
    // Predicated region
    $region18: #{tpu_custom_call.1} parent=1 // pred_check
      _
    $region19: #{tpu_custom_call.1} parent=1 // pred_check_branch
      %57 = sbr.rel (0) target = $region21
    $region20: #{tpu_custom_call.1} parent=1 // pred_region
      _
    $region21: #{tpu_custom_call.1} parent=1 // pred_fallthru
      _
    // Predicated region
    $region22: #{tpu_custom_call.1} parent=1 // pred_check
      _
    $region23: #{tpu_custom_call.1} parent=1 // pred_check_branch
      %59 = sbr.rel (0) target = $region25
    $region24: #{tpu_custom_call.1} parent=1 // pred_region
      %s61 = ssub.s32 4096, 4096
      %62 = vsyncadd [#allocation9], %s61
      %s63 = sshll.u32 [#allocation8], 4
      %s64 = int_to_ptr.vmem [resolvable:$true] %s63
      %69 = dma.hbm_to_vmem [thread:$0]  %s5, 4096, %s64, [#allocation9], 128, 128, 8
    $region25: #{tpu_custom_call.1} parent=1 // pred_fallthru
      _
    // Predicated region
    $region26: #{tpu_custom_call.1} parent=1 // pred_check
      _
    $region27: #{tpu_custom_call.1} parent=1 // pred_check_branch
      %71 = sbr.rel (0) target = $region29
    $region28: #{tpu_custom_call.1} parent=1 // pred_region
      _
    $region29: #{tpu_custom_call.1} parent=1 // pred_fallthru
      _
    // Predicated region
    $region30: #{tpu_custom_call.1} parent=1 // pred_check
      _
    $region31: #{tpu_custom_call.1} parent=1 // pred_check_branch
      %73 = sbr.rel (0) target = $region33
    $region32: #{tpu_custom_call.1} parent=1 // pred_region
      %s75 = ssub.s32 2048, 2048
      %76 = vsyncadd [#allocation9], %s75
      %s77 = sshll.u32 [#allocation10], 4
      %s78 = int_to_ptr.vmem [resolvable:$true] %s77
      %83 = dma.hbm_to_vmem [thread:$0]  %s7, 2048, %s78, [#allocation9], 64, 64, 4
    $region33: #{tpu_custom_call.1} parent=1 // pred_fallthru
      _
    // Predicated region
    $region34: #{tpu_custom_call.1} parent=1 // pred_check
      _
    $region35: #{tpu_custom_call.1} parent=1 // pred_check_branch
      %85 = sbr.rel (0) target = $region37
    $region36: #{tpu_custom_call.1} parent=1 // pred_region
      _
    $region37: #{tpu_custom_call.1} parent=1 // pred_fallthru
      _
    // Predicated region
    $region38: #{tpu_custom_call.1} parent=1 // pred_check
      _
    $region39: #{tpu_custom_call.1} parent=1 // pred_check_branch
      %87 = sbr.rel (0) target = $region41
    $region40: #{tpu_custom_call.1} parent=1 // pred_region
      %88 = dma.done [#allocation3], 128
    $region41: #{tpu_custom_call.1} parent=1 // pred_fallthru
      _
    // Predicated region
    $region42: #{tpu_custom_call.1} parent=1 // pred_check
      _
    $region43: #{tpu_custom_call.1} parent=1 // pred_check_branch
      %90 = sbr.rel (0) target = $region45
    $region44: #{tpu_custom_call.1} parent=1 // pred_region
      %91 = dma.done [#allocation6], 2048
    $region45: #{tpu_custom_call.1} parent=1 // pred_fallthru
      _
    // Predicated region
    $region46: #{tpu_custom_call.1} parent=1 // pred_check
      _
    $region47: #{tpu_custom_call.1} parent=1 // pred_check_branch
      %93 = sbr.rel (0) target = $region49
    $region48: #{tpu_custom_call.1} parent=1 // pred_region
      %94 = dma.done [#allocation6], 4096
    $region49: #{tpu_custom_call.1} parent=1 // pred_fallthru
      _
    // Predicated region
    $region50: #{tpu_custom_call.1} parent=1 // pred_check
      _
    $region51: #{tpu_custom_call.1} parent=1 // pred_check_branch
      %96 = sbr.rel (0) target = $region53
    $region52: #{tpu_custom_call.1} parent=1 // pred_region
      %97 = dma.done [#allocation9], 4096
    $region53: #{tpu_custom_call.1} parent=1 // pred_fallthru
      _
    // Predicated region
    $region54: #{tpu_custom_call.1} parent=1 // pred_check
      _
    $region55: #{tpu_custom_call.1} parent=1 // pred_check_branch
      %99 = sbr.rel (0) target = $region57
    $region56: #{tpu_custom_call.1} parent=1 // pred_region
      %100 = dma.done [#allocation9], 2048
    $region57: #{tpu_custom_call.1} parent=1 // pred_fallthru
      _
    %v102 = vld [vmem:[#allocation2] sm:$0xf]
    %v103 = vld [vmem:[#allocation2 + $0x4] sm:$0xf]
    %v104 = vld [vmem:[#allocation5] sm:$0xff]
    %v105 = vld [vmem:[#allocation5 + $0x8] sm:$0xff]
    %v106 = vld [vmem:[#allocation5 + $0x10] sm:$0xff]
    %v107 = vld [vmem:[#allocation5 + $0x18] sm:$0xff]
    %v108 = vld [vmem:[#allocation5 + $0x20] sm:$0xff]
    %v109 = vld [vmem:[#allocation5 + $0x28] sm:$0xff]
    %v110 = vld [vmem:[#allocation5 + $0x30] sm:$0xff]
    %v111 = vld [vmem:[#allocation5 + $0x38] sm:$0xff]
    %v112 = vld [vmem:[#allocation5 + $0x40] sm:$0xff]
    %v113 = vld [vmem:[#allocation5 + $0x48] sm:$0xff]
    %v114 = vld [vmem:[#allocation5 + $0x50] sm:$0xff]
    %v115 = vld [vmem:[#allocation5 + $0x58] sm:$0xff]
    %v116 = vld [vmem:[#allocation5 + $0x60] sm:$0xff]
    %v117 = vld [vmem:[#allocation5 + $0x68] sm:$0xff]
    %v118 = vld [vmem:[#allocation5 + $0x70] sm:$0xff]
    %v119 = vld [vmem:[#allocation5 + $0x78] sm:$0xff]
    %v122 = vunpack.c.l.b16 %v102
    %v123 = vunpack.c.l.b16 %v103
    %v124 = vpack.c.b16 %v123, %v122
    %v142 = vunpack.c.l.b16 %v104
    %v143 = vunpack.c.h.b16 %v104
    %v144 = vunpack.c.l.b16 %v105
    %v145 = vunpack.c.h.b16 %v105
    %v146 = vunpack.c.l.b16 %v106
    %v147 = vunpack.c.h.b16 %v106
    %v148 = vunpack.c.l.b16 %v107
    %v149 = vunpack.c.h.b16 %v107
    %v150 = vunpack.c.l.b16 %v108
    %v151 = vunpack.c.h.b16 %v108
    %v152 = vunpack.c.l.b16 %v109
    %v153 = vunpack.c.h.b16 %v109
    %v154 = vunpack.c.l.b16 %v110
    %v155 = vunpack.c.h.b16 %v110
    %v156 = vunpack.c.l.b16 %v111
    %v157 = vunpack.c.h.b16 %v111
    %v158 = vunpack.c.l.b16 %v112
    %v159 = vunpack.c.h.b16 %v112
    %v160 = vunpack.c.l.b16 %v113
    %v161 = vunpack.c.h.b16 %v113
    %v162 = vunpack.c.l.b16 %v114
    %v163 = vunpack.c.h.b16 %v114
    %v164 = vunpack.c.l.b16 %v115
    %v165 = vunpack.c.h.b16 %v115
    %v166 = vunpack.c.l.b16 %v116
    %v167 = vunpack.c.h.b16 %v116
    %v168 = vunpack.c.l.b16 %v117
    %v169 = vunpack.c.h.b16 %v117
    %v170 = vunpack.c.l.b16 %v118
    %v171 = vunpack.c.h.b16 %v118
    %v172 = vunpack.c.l.b16 %v119
    %v173 = vunpack.c.h.b16 %v119
    %v174 = vpack.c.b16 %v144, %v142
    %v175 = vpack.c.b16 %v145, %v143
    %v176 = vpack.c.b16 %v148, %v146
    %v177 = vpack.c.b16 %v149, %v147
    %v178 = vpack.c.b16 %v152, %v150
    %v179 = vpack.c.b16 %v153, %v151
    %v180 = vpack.c.b16 %v156, %v154
    %v181 = vpack.c.b16 %v157, %v155
    %v182 = vpack.c.b16 %v160, %v158
    %v183 = vpack.c.b16 %v161, %v159
    %v184 = vpack.c.b16 %v164, %v162
    %v185 = vpack.c.b16 %v165, %v163
    %v186 = vpack.c.b16 %v168, %v166
    %v187 = vpack.c.b16 %v169, %v167
    %v188 = vpack.c.b16 %v172, %v170
    %v189 = vpack.c.b16 %v173, %v171
    %206 = vmatprep.subr.bf16.mxu0 %v189
    %207 = vmatpush1.bf16.msra.mxu0 %v188
    %208 = vmatprep.subr.bf16.mxu0 %v187
    %209 = vmatpush1.bf16.msra.mxu0 %v186
    %210 = vmatprep.subr.bf16.mxu0 %v185
    %211 = vmatpush1.bf16.msra.mxu0 %v184
    %212 = vmatprep.subr.bf16.mxu0 %v183
    %213 = vmatpush1.bf16.msra.mxu0 %v182
    %214 = vmatprep.subr.bf16.mxu0 %v181
    %215 = vmatpush1.bf16.msra.mxu0 %v180
    %216 = vmatprep.subr.bf16.mxu0 %v179
    %217 = vmatpush1.bf16.msra.mxu0 %v178
    %218 = vmatprep.subr.bf16.mxu0 %v177
    %219 = vmatpush1.bf16.msra.mxu0 %v176
    %220 = vmatprep.subr.bf16.mxu0 %v175
    %221 = vmatpush1.bf16.msra.mxu0 %v174
    %222 = vmatprep.subr.bf16.mxu0 0
    %223 = vmatpush2.bf16.msra.mxu0 0
    %224 = vmatprep.subr.bf16.mxu0 0
    %225 = vmatpush2.bf16.msra.mxu0 0
    %226 = vmatprep.subr.bf16.mxu0 0
    %227 = vmatpush2.bf16.msra.mxu0 0
    %228 = vmatprep.subr.bf16.mxu0 0
    %229 = vmatpush2.bf16.msra.mxu0 0
    %230 = vmatprep.subr.bf16.mxu0 0
    %231 = vmatpush2.bf16.msra.mxu0 0
    %232 = vmatprep.subr.bf16.mxu0 0
    %233 = vmatpush2.bf16.msra.mxu0 0
    %234 = vmatprep.subr.bf16.mxu0 0
    %235 = vmatpush2.bf16.msra.mxu0 0
    %236 = vmatprep.subr.bf16.mxu0 0
    %237 = vmatpush2.bf16.msra.mxu0 0
    %238 = vmatprep.mubr.bf16.mxu0 0
    %239 = vmatmul.mubr.bf16.gmra.mxu0 %v124
    %v240 = vpop.f32.mrf.mxu0
    %v241 = vadd.f32 0.0, %v240
    %v242 = vpop.f32.mrf.mxu0
    %v243 = vadd.f32 0.0, %v242
    %v244 = vpop.f32.mrf.mxu0
    %v245 = vadd.f32 0.0, %v244
    %v246 = vpop.f32.mrf.mxu0
    %v247 = vadd.f32 0.0, %v246
    %248 = vdwg.mxu0
    %v249 = vpack.c.bf16 %v245, %v241
    %v250 = vpack.c.bf16 %v247, %v243
    %v251 = vld [vmem:[%s2] sm:$0x3]
    %v253 = vlaneseq
    %v254 = vshrl.u32 %v253, 7
    %v255 = vsub.s32 0, %v254
    %v256 = vrot.slane %v251, %v255
    %v257 = vlaneseq
    %v258 = vshrl.u32 %v257, 7
    %v259 = vsub.s32 1, %v258
    %v260 = vrot.slane %v251, %v259
    %v263 = vpack.c.bf16 %v256, %v256
    %v264 = vpack.c.bf16 %v260, %v260
    %v266 = vpack.i.b16 %v263, %v263
    %v268 = vlaneseq
    %v269 = vshrl.u32 %v268, 7
    %v270 = vsub.s32 0, %v269
    %v271 = vrot.slane %v266, %v270
    %v273 = vpack.i.b16 %v264, %v264
    %v275 = vlaneseq
    %v276 = vshrl.u32 %v275, 7
    %v277 = vsub.s32 0, %v276
    %v278 = vrot.slane %v273, %v277
    %v279 = vadd.bf16 %v249, %v271
    %v280 = vadd.bf16 %v250, %v278
    %v281 = vmax.bf16 %v279, 0
    %v282 = vmax.bf16 %v280, 0
    %v283 = vld [vmem:[#allocation7] sm:$0xff]
    %v284 = vld [vmem:[#allocation7 + $0x8] sm:$0xff]
    %v285 = vld [vmem:[#allocation7 + $0x10] sm:$0xff]
    %v286 = vld [vmem:[#allocation7 + $0x18] sm:$0xff]
    %v287 = vld [vmem:[#allocation7 + $0x20] sm:$0xff]
    %v288 = vld [vmem:[#allocation7 + $0x28] sm:$0xff]
    %v289 = vld [vmem:[#allocation7 + $0x30] sm:$0xff]
    %v290 = vld [vmem:[#allocation7 + $0x38] sm:$0xff]
    %v291 = vld [vmem:[#allocation7 + $0x40] sm:$0xff]
    %v292 = vld [vmem:[#allocation7 + $0x48] sm:$0xff]
    %v293 = vld [vmem:[#allocation7 + $0x50] sm:$0xff]
    %v294 = vld [vmem:[#allocation7 + $0x58] sm:$0xff]
    %v295 = vld [vmem:[#allocation7 + $0x60] sm:$0xff]
    %v296 = vld [vmem:[#allocation7 + $0x68] sm:$0xff]
    %v297 = vld [vmem:[#allocation7 + $0x70] sm:$0xff]
    %v298 = vld [vmem:[#allocation7 + $0x78] sm:$0xff]
    %v299 = vld [vmem:[#allocation7 + $0x80] sm:$0xff]
    %v300 = vld [vmem:[#allocation7 + $0x88] sm:$0xff]
    %v301 = vld [vmem:[#allocation7 + $0x90] sm:$0xff]
    %v302 = vld [vmem:[#allocation7 + $0x98] sm:$0xff]
    %v303 = vld [vmem:[#allocation7 + $0xa0] sm:$0xff]
    %v304 = vld [vmem:[#allocation7 + $0xa8] sm:$0xff]
    %v305 = vld [vmem:[#allocation7 + $0xb0] sm:$0xff]
    %v306 = vld [vmem:[#allocation7 + $0xb8] sm:$0xff]
    %v307 = vld [vmem:[#allocation7 + $0xc0] sm:$0xff]
    %v308 = vld [vmem:[#allocation7 + $0xc8] sm:$0xff]
    %v309 = vld [vmem:[#allocation7 + $0xd0] sm:$0xff]
    %v310 = vld [vmem:[#allocation7 + $0xd8] sm:$0xff]
    %v311 = vld [vmem:[#allocation7 + $0xe0] sm:$0xff]
    %v312 = vld [vmem:[#allocation7 + $0xe8] sm:$0xff]
    %v313 = vld [vmem:[#allocation7 + $0xf0] sm:$0xff]
    %v314 = vld [vmem:[#allocation7 + $0xf8] sm:$0xff]
    %v347 = vunpack.c.l.b16 %v283
    %v348 = vunpack.c.h.b16 %v283
    %v349 = vunpack.c.l.b16 %v284
    %v350 = vunpack.c.h.b16 %v284
    %v351 = vunpack.c.l.b16 %v285
    %v352 = vunpack.c.h.b16 %v285
    %v353 = vunpack.c.l.b16 %v286
    %v354 = vunpack.c.h.b16 %v286
    %v355 = vunpack.c.l.b16 %v287
    %v356 = vunpack.c.h.b16 %v287
    %v357 = vunpack.c.l.b16 %v288
    %v358 = vunpack.c.h.b16 %v288
    %v359 = vunpack.c.l.b16 %v289
    %v360 = vunpack.c.h.b16 %v289
    %v361 = vunpack.c.l.b16 %v290
    %v362 = vunpack.c.h.b16 %v290
    %v363 = vunpack.c.l.b16 %v291
    %v364 = vunpack.c.h.b16 %v291
    %v365 = vunpack.c.l.b16 %v292
    %v366 = vunpack.c.h.b16 %v292
    %v367 = vunpack.c.l.b16 %v293
    %v368 = vunpack.c.h.b16 %v293
    %v369 = vunpack.c.l.b16 %v294
    %v370 = vunpack.c.h.b16 %v294
    %v371 = vunpack.c.l.b16 %v295
    %v372 = vunpack.c.h.b16 %v295
    %v373 = vunpack.c.l.b16 %v296
    %v374 = vunpack.c.h.b16 %v296
    %v375 = vunpack.c.l.b16 %v297
    %v376 = vunpack.c.h.b16 %v297
    %v377 = vunpack.c.l.b16 %v298
    %v378 = vunpack.c.h.b16 %v298
    %v379 = vunpack.c.l.b16 %v299
    %v380 = vunpack.c.h.b16 %v299
    %v381 = vunpack.c.l.b16 %v300
    %v382 = vunpack.c.h.b16 %v300
    %v383 = vunpack.c.l.b16 %v301
    %v384 = vunpack.c.h.b16 %v301
    %v385 = vunpack.c.l.b16 %v302
    %v386 = vunpack.c.h.b16 %v302
    %v387 = vunpack.c.l.b16 %v303
    %v388 = vunpack.c.h.b16 %v303
    %v389 = vunpack.c.l.b16 %v304
    %v390 = vunpack.c.h.b16 %v304
    %v391 = vunpack.c.l.b16 %v305
    %v392 = vunpack.c.h.b16 %v305
    %v393 = vunpack.c.l.b16 %v306
    %v394 = vunpack.c.h.b16 %v306
    %v395 = vunpack.c.l.b16 %v307
    %v396 = vunpack.c.h.b16 %v307
    %v397 = vunpack.c.l.b16 %v308
    %v398 = vunpack.c.h.b16 %v308
    %v399 = vunpack.c.l.b16 %v309
    %v400 = vunpack.c.h.b16 %v309
    %v401 = vunpack.c.l.b16 %v310
    %v402 = vunpack.c.h.b16 %v310
    %v403 = vunpack.c.l.b16 %v311
    %v404 = vunpack.c.h.b16 %v311
    %v405 = vunpack.c.l.b16 %v312
    %v406 = vunpack.c.h.b16 %v312
    %v407 = vunpack.c.l.b16 %v313
    %v408 = vunpack.c.h.b16 %v313
    %v409 = vunpack.c.l.b16 %v314
    %v410 = vunpack.c.h.b16 %v314
    %v411 = vpack.c.b16 %v349, %v347
    %v412 = vpack.c.b16 %v350, %v348
    %v413 = vpack.c.b16 %v353, %v351
    %v414 = vpack.c.b16 %v354, %v352
    %v415 = vpack.c.b16 %v357, %v355
    %v416 = vpack.c.b16 %v358, %v356
    %v417 = vpack.c.b16 %v361, %v359
    %v418 = vpack.c.b16 %v362, %v360
    %v419 = vpack.c.b16 %v365, %v363
    %v420 = vpack.c.b16 %v366, %v364
    %v421 = vpack.c.b16 %v369, %v367
    %v422 = vpack.c.b16 %v370, %v368
    %v423 = vpack.c.b16 %v373, %v371
    %v424 = vpack.c.b16 %v374, %v372
    %v425 = vpack.c.b16 %v377, %v375
    %v426 = vpack.c.b16 %v378, %v376
    %v427 = vpack.c.b16 %v381, %v379
    %v428 = vpack.c.b16 %v382, %v380
    %v429 = vpack.c.b16 %v385, %v383
    %v430 = vpack.c.b16 %v386, %v384
    %v431 = vpack.c.b16 %v389, %v387
    %v432 = vpack.c.b16 %v390, %v388
    %v433 = vpack.c.b16 %v393, %v391
    %v434 = vpack.c.b16 %v394, %v392
    %v435 = vpack.c.b16 %v397, %v395
    %v436 = vpack.c.b16 %v398, %v396
    %v437 = vpack.c.b16 %v401, %v399
    %v438 = vpack.c.b16 %v402, %v400
    %v439 = vpack.c.b16 %v405, %v403
    %v440 = vpack.c.b16 %v406, %v404
    %v441 = vpack.c.b16 %v409, %v407
    %v442 = vpack.c.b16 %v410, %v408
    %475 = vmatprep.subr.bf16.mxu0 %v426
    %476 = vmatpush1.bf16.msra.mxu0 %v425
    %477 = vmatprep.subr.bf16.mxu0 %v424
    %478 = vmatpush1.bf16.msra.mxu0 %v423
    %479 = vmatprep.subr.bf16.mxu0 %v422
    %480 = vmatpush1.bf16.msra.mxu0 %v421
    %481 = vmatprep.subr.bf16.mxu0 %v420
    %482 = vmatpush1.bf16.msra.mxu0 %v419
    %483 = vmatprep.subr.bf16.mxu0 %v418
    %484 = vmatpush1.bf16.msra.mxu0 %v417
    %485 = vmatprep.subr.bf16.mxu0 %v416
    %486 = vmatpush1.bf16.msra.mxu0 %v415
    %487 = vmatprep.subr.bf16.mxu0 %v414
    %488 = vmatpush1.bf16.msra.mxu0 %v413
    %489 = vmatprep.subr.bf16.mxu0 %v412
    %490 = vmatpush1.bf16.msra.mxu0 %v411
    %491 = vmatprep.subr.bf16.mxu0 %v442
    %492 = vmatpush2.bf16.msra.mxu0 %v441
    %493 = vmatprep.subr.bf16.mxu0 %v440
    %494 = vmatpush2.bf16.msra.mxu0 %v439
    %495 = vmatprep.subr.bf16.mxu0 %v438
    %496 = vmatpush2.bf16.msra.mxu0 %v437
    %497 = vmatprep.subr.bf16.mxu0 %v436
    %498 = vmatpush2.bf16.msra.mxu0 %v435
    %499 = vmatprep.subr.bf16.mxu0 %v434
    %500 = vmatpush2.bf16.msra.mxu0 %v433
    %501 = vmatprep.subr.bf16.mxu0 %v432
    %502 = vmatpush2.bf16.msra.mxu0 %v431
    %503 = vmatprep.subr.bf16.mxu0 %v430
    %504 = vmatpush2.bf16.msra.mxu0 %v429
    %505 = vmatprep.subr.bf16.mxu0 %v428
    %506 = vmatpush2.bf16.msra.mxu0 %v427
    %507 = vmatprep.mubr.bf16.mxu0 %v282
    %508 = vmatmul.mubr.bf16.gmra.mxu0 %v281
    %v509 = vpop.f32.mrf.mxu0
    %v510 = vadd.f32 0.0, %v509
    %v511 = vpop.f32.mrf.mxu0
    %v512 = vadd.f32 0.0, %v511
    %v513 = vpop.f32.mrf.mxu0
    %v514 = vadd.f32 0.0, %v513
    %v515 = vpop.f32.mrf.mxu0
    %v516 = vadd.f32 0.0, %v515
    %517 = vdwg.mxu0
    %v518 = vpack.c.bf16 %v514, %v510
    %v519 = vpack.c.bf16 %v516, %v512
    %v520 = vld [vmem:[%s4] sm:$0x3]
    %v522 = vlaneseq
    %v523 = vshrl.u32 %v522, 7
    %v524 = vsub.s32 0, %v523
    %v525 = vrot.slane %v520, %v524
    %v526 = vlaneseq
    %v527 = vshrl.u32 %v526, 7
    %v528 = vsub.s32 1, %v527
    %v529 = vrot.slane %v520, %v528
    %v532 = vpack.c.bf16 %v525, %v525
    %v533 = vpack.c.bf16 %v529, %v529
    %v535 = vpack.i.b16 %v532, %v532
    %v537 = vlaneseq
    %v538 = vshrl.u32 %v537, 7
    %v539 = vsub.s32 0, %v538
    %v540 = vrot.slane %v535, %v539
    %v542 = vpack.i.b16 %v533, %v533
    %v544 = vlaneseq
    %v545 = vshrl.u32 %v544, 7
    %v546 = vsub.s32 0, %v545
    %v547 = vrot.slane %v542, %v546
    %v548 = vadd.bf16 %v518, %v540
    %v549 = vadd.bf16 %v519, %v547
    %v550 = vmax.bf16 %v548, 0
    %v551 = vmax.bf16 %v549, 0
    %v552 = vld [vmem:[#allocation8] sm:$0xff]
    %v553 = vld [vmem:[#allocation8 + $0x8] sm:$0xff]
    %v554 = vld [vmem:[#allocation8 + $0x10] sm:$0xff]
    %v555 = vld [vmem:[#allocation8 + $0x18] sm:$0xff]
    %v556 = vld [vmem:[#allocation8 + $0x20] sm:$0xff]
    %v557 = vld [vmem:[#allocation8 + $0x28] sm:$0xff]
    %v558 = vld [vmem:[#allocation8 + $0x30] sm:$0xff]
    %v559 = vld [vmem:[#allocation8 + $0x38] sm:$0xff]
    %v560 = vld [vmem:[#allocation8 + $0x40] sm:$0xff]
    %v561 = vld [vmem:[#allocation8 + $0x48] sm:$0xff]
    %v562 = vld [vmem:[#allocation8 + $0x50] sm:$0xff]
    %v563 = vld [vmem:[#allocation8 + $0x58] sm:$0xff]
    %v564 = vld [vmem:[#allocation8 + $0x60] sm:$0xff]
    %v565 = vld [vmem:[#allocation8 + $0x68] sm:$0xff]
    %v566 = vld [vmem:[#allocation8 + $0x70] sm:$0xff]
    %v567 = vld [vmem:[#allocation8 + $0x78] sm:$0xff]
    %v568 = vld [vmem:[#allocation8 + $0x80] sm:$0xff]
    %v569 = vld [vmem:[#allocation8 + $0x88] sm:$0xff]
    %v570 = vld [vmem:[#allocation8 + $0x90] sm:$0xff]
    %v571 = vld [vmem:[#allocation8 + $0x98] sm:$0xff]
    %v572 = vld [vmem:[#allocation8 + $0xa0] sm:$0xff]
    %v573 = vld [vmem:[#allocation8 + $0xa8] sm:$0xff]
    %v574 = vld [vmem:[#allocation8 + $0xb0] sm:$0xff]
    %v575 = vld [vmem:[#allocation8 + $0xb8] sm:$0xff]
    %v576 = vld [vmem:[#allocation8 + $0xc0] sm:$0xff]
    %v577 = vld [vmem:[#allocation8 + $0xc8] sm:$0xff]
    %v578 = vld [vmem:[#allocation8 + $0xd0] sm:$0xff]
    %v579 = vld [vmem:[#allocation8 + $0xd8] sm:$0xff]
    %v580 = vld [vmem:[#allocation8 + $0xe0] sm:$0xff]
    %v581 = vld [vmem:[#allocation8 + $0xe8] sm:$0xff]
    %v582 = vld [vmem:[#allocation8 + $0xf0] sm:$0xff]
    %v583 = vld [vmem:[#allocation8 + $0xf8] sm:$0xff]
    %v616 = vunpack.c.l.b16 %v552
    %v617 = vunpack.c.h.b16 %v552
    %v618 = vunpack.c.l.b16 %v553
    %v619 = vunpack.c.h.b16 %v553
    %v620 = vunpack.c.l.b16 %v554
    %v621 = vunpack.c.h.b16 %v554
    %v622 = vunpack.c.l.b16 %v555
    %v623 = vunpack.c.h.b16 %v555
    %v624 = vunpack.c.l.b16 %v556
    %v625 = vunpack.c.h.b16 %v556
    %v626 = vunpack.c.l.b16 %v557
    %v627 = vunpack.c.h.b16 %v557
    %v628 = vunpack.c.l.b16 %v558
    %v629 = vunpack.c.h.b16 %v558
    %v630 = vunpack.c.l.b16 %v559
    %v631 = vunpack.c.h.b16 %v559
    %v632 = vunpack.c.l.b16 %v560
    %v633 = vunpack.c.h.b16 %v560
    %v634 = vunpack.c.l.b16 %v561
    %v635 = vunpack.c.h.b16 %v561
    %v636 = vunpack.c.l.b16 %v562
    %v637 = vunpack.c.h.b16 %v562
    %v638 = vunpack.c.l.b16 %v563
    %v639 = vunpack.c.h.b16 %v563
    %v640 = vunpack.c.l.b16 %v564
    %v641 = vunpack.c.h.b16 %v564
    %v642 = vunpack.c.l.b16 %v565
    %v643 = vunpack.c.h.b16 %v565
    %v644 = vunpack.c.l.b16 %v566
    %v645 = vunpack.c.h.b16 %v566
    %v646 = vunpack.c.l.b16 %v567
    %v647 = vunpack.c.h.b16 %v567
    %v648 = vunpack.c.l.b16 %v568
    %v649 = vunpack.c.h.b16 %v568
    %v650 = vunpack.c.l.b16 %v569
    %v651 = vunpack.c.h.b16 %v569
    %v652 = vunpack.c.l.b16 %v570
    %v653 = vunpack.c.h.b16 %v570
    %v654 = vunpack.c.l.b16 %v571
    %v655 = vunpack.c.h.b16 %v571
    %v656 = vunpack.c.l.b16 %v572
    %v657 = vunpack.c.h.b16 %v572
    %v658 = vunpack.c.l.b16 %v573
    %v659 = vunpack.c.h.b16 %v573
    %v660 = vunpack.c.l.b16 %v574
    %v661 = vunpack.c.h.b16 %v574
    %v662 = vunpack.c.l.b16 %v575
    %v663 = vunpack.c.h.b16 %v575
    %v664 = vunpack.c.l.b16 %v576
    %v665 = vunpack.c.h.b16 %v576
    %v666 = vunpack.c.l.b16 %v577
    %v667 = vunpack.c.h.b16 %v577
    %v668 = vunpack.c.l.b16 %v578
    %v669 = vunpack.c.h.b16 %v578
    %v670 = vunpack.c.l.b16 %v579
    %v671 = vunpack.c.h.b16 %v579
    %v672 = vunpack.c.l.b16 %v580
    %v673 = vunpack.c.h.b16 %v580
    %v674 = vunpack.c.l.b16 %v581
    %v675 = vunpack.c.h.b16 %v581
    %v676 = vunpack.c.l.b16 %v582
    %v677 = vunpack.c.h.b16 %v582
    %v678 = vunpack.c.l.b16 %v583
    %v679 = vunpack.c.h.b16 %v583
    %v680 = vpack.c.b16 %v618, %v616
    %v681 = vpack.c.b16 %v619, %v617
    %v682 = vpack.c.b16 %v622, %v620
    %v683 = vpack.c.b16 %v623, %v621
    %v684 = vpack.c.b16 %v626, %v624
    %v685 = vpack.c.b16 %v627, %v625
    %v686 = vpack.c.b16 %v630, %v628
    %v687 = vpack.c.b16 %v631, %v629
    %v688 = vpack.c.b16 %v634, %v632
    %v689 = vpack.c.b16 %v635, %v633
    %v690 = vpack.c.b16 %v638, %v636
    %v691 = vpack.c.b16 %v639, %v637
    %v692 = vpack.c.b16 %v642, %v640
    %v693 = vpack.c.b16 %v643, %v641
    %v694 = vpack.c.b16 %v646, %v644
    %v695 = vpack.c.b16 %v647, %v645
    %v696 = vpack.c.b16 %v650, %v648
    %v697 = vpack.c.b16 %v651, %v649
    %v698 = vpack.c.b16 %v654, %v652
    %v699 = vpack.c.b16 %v655, %v653
    %v700 = vpack.c.b16 %v658, %v656
    %v701 = vpack.c.b16 %v659, %v657
    %v702 = vpack.c.b16 %v662, %v660
    %v703 = vpack.c.b16 %v663, %v661
    %v704 = vpack.c.b16 %v666, %v664
    %v705 = vpack.c.b16 %v667, %v665
    %v706 = vpack.c.b16 %v670, %v668
    %v707 = vpack.c.b16 %v671, %v669
    %v708 = vpack.c.b16 %v674, %v672
    %v709 = vpack.c.b16 %v675, %v673
    %v710 = vpack.c.b16 %v678, %v676
    %v711 = vpack.c.b16 %v679, %v677
    %744 = vmatprep.subr.bf16.mxu0 %v695
    %745 = vmatpush1.bf16.msra.mxu0 %v694
    %746 = vmatprep.subr.bf16.mxu0 %v693
    %747 = vmatpush1.bf16.msra.mxu0 %v692
    %748 = vmatprep.subr.bf16.mxu0 %v691
    %749 = vmatpush1.bf16.msra.mxu0 %v690
    %750 = vmatprep.subr.bf16.mxu0 %v689
    %751 = vmatpush1.bf16.msra.mxu0 %v688
    %752 = vmatprep.subr.bf16.mxu0 %v687
    %753 = vmatpush1.bf16.msra.mxu0 %v686
    %754 = vmatprep.subr.bf16.mxu0 %v685
    %755 = vmatpush1.bf16.msra.mxu0 %v684
    %756 = vmatprep.subr.bf16.mxu0 %v683
    %757 = vmatpush1.bf16.msra.mxu0 %v682
    %758 = vmatprep.subr.bf16.mxu0 %v681
    %759 = vmatpush1.bf16.msra.mxu0 %v680
    %760 = vmatprep.subr.bf16.mxu0 %v711
    %761 = vmatpush2.bf16.msra.mxu0 %v710
    %762 = vmatprep.subr.bf16.mxu0 %v709
    %763 = vmatpush2.bf16.msra.mxu0 %v708
    %764 = vmatprep.subr.bf16.mxu0 %v707
    %765 = vmatpush2.bf16.msra.mxu0 %v706
    %766 = vmatprep.subr.bf16.mxu0 %v705
    %767 = vmatpush2.bf16.msra.mxu0 %v704
    %768 = vmatprep.subr.bf16.mxu0 %v703
    %769 = vmatpush2.bf16.msra.mxu0 %v702
    %770 = vmatprep.subr.bf16.mxu0 %v701
    %771 = vmatpush2.bf16.msra.mxu0 %v700
    %772 = vmatprep.subr.bf16.mxu0 %v699
    %773 = vmatpush2.bf16.msra.mxu0 %v698
    %774 = vmatprep.subr.bf16.mxu0 %v697
    %775 = vmatpush2.bf16.msra.mxu0 %v696
    %776 = vmatprep.mubr.bf16.mxu0 %v551
    %777 = vmatmul.mubr.bf16.gmra.mxu0 %v550
    %v778 = vpop.f32.mrf.mxu0
    %v779 = vadd.f32 0.0, %v778
    %v780 = vpop.f32.mrf.mxu0
    %v781 = vadd.f32 0.0, %v780
    %v782 = vpop.f32.mrf.mxu0
    %v783 = vadd.f32 0.0, %v782
    %v784 = vpop.f32.mrf.mxu0
    %v785 = vadd.f32 0.0, %v784
    %786 = vdwg.mxu0
    %v787 = vpack.c.bf16 %v783, %v779
    %v788 = vpack.c.bf16 %v785, %v781
    %v789 = vld [vmem:[%s6] sm:$0x3]
    %v791 = vlaneseq
    %v792 = vshrl.u32 %v791, 7
    %v793 = vsub.s32 0, %v792
    %v794 = vrot.slane %v789, %v793
    %v795 = vlaneseq
    %v796 = vshrl.u32 %v795, 7
    %v797 = vsub.s32 1, %v796
    %v798 = vrot.slane %v789, %v797
    %v801 = vpack.c.bf16 %v794, %v794
    %v802 = vpack.c.bf16 %v798, %v798
    %v804 = vpack.i.b16 %v801, %v801
    %v806 = vlaneseq
    %v807 = vshrl.u32 %v806, 7
    %v808 = vsub.s32 0, %v807
    %v809 = vrot.slane %v804, %v808
    %v811 = vpack.i.b16 %v802, %v802
    %v813 = vlaneseq
    %v814 = vshrl.u32 %v813, 7
    %v815 = vsub.s32 0, %v814
    %v816 = vrot.slane %v811, %v815
    %v817 = vadd.bf16 %v787, %v809
    %v818 = vadd.bf16 %v788, %v816
    %v819 = vmax.bf16 %v817, 0
    %v820 = vmax.bf16 %v818, 0
    %v821 = vld [vmem:[#allocation10] sm:$0xf]
    %v822 = vld [vmem:[#allocation10 + $0x4] sm:$0xf]
    %v823 = vld [vmem:[#allocation10 + $0x8] sm:$0xf]
    %v824 = vld [vmem:[#allocation10 + $0xc] sm:$0xf]
    %v825 = vld [vmem:[#allocation10 + $0x10] sm:$0xf]
    %v826 = vld [vmem:[#allocation10 + $0x14] sm:$0xf]
    %v827 = vld [vmem:[#allocation10 + $0x18] sm:$0xf]
    %v828 = vld [vmem:[#allocation10 + $0x1c] sm:$0xf]
    %v829 = vld [vmem:[#allocation10 + $0x20] sm:$0xf]
    %v830 = vld [vmem:[#allocation10 + $0x24] sm:$0xf]
    %v831 = vld [vmem:[#allocation10 + $0x28] sm:$0xf]
    %v832 = vld [vmem:[#allocation10 + $0x2c] sm:$0xf]
    %v833 = vld [vmem:[#allocation10 + $0x30] sm:$0xf]
    %v834 = vld [vmem:[#allocation10 + $0x34] sm:$0xf]
    %v835 = vld [vmem:[#allocation10 + $0x38] sm:$0xf]
    %v836 = vld [vmem:[#allocation10 + $0x3c] sm:$0xf]
    %v837 = vld [vmem:[#allocation10 + $0x40] sm:$0xf]
    %v838 = vld [vmem:[#allocation10 + $0x44] sm:$0xf]
    %v839 = vld [vmem:[#allocation10 + $0x48] sm:$0xf]
    %v840 = vld [vmem:[#allocation10 + $0x4c] sm:$0xf]
    %v841 = vld [vmem:[#allocation10 + $0x50] sm:$0xf]
    %v842 = vld [vmem:[#allocation10 + $0x54] sm:$0xf]
    %v843 = vld [vmem:[#allocation10 + $0x58] sm:$0xf]
    %v844 = vld [vmem:[#allocation10 + $0x5c] sm:$0xf]
    %v845 = vld [vmem:[#allocation10 + $0x60] sm:$0xf]
    %v846 = vld [vmem:[#allocation10 + $0x64] sm:$0xf]
    %v847 = vld [vmem:[#allocation10 + $0x68] sm:$0xf]
    %v848 = vld [vmem:[#allocation10 + $0x6c] sm:$0xf]
    %v849 = vld [vmem:[#allocation10 + $0x70] sm:$0xf]
    %v850 = vld [vmem:[#allocation10 + $0x74] sm:$0xf]
    %v851 = vld [vmem:[#allocation10 + $0x78] sm:$0xf]
    %v852 = vld [vmem:[#allocation10 + $0x7c] sm:$0xf]
    %v853 = vld [vmem:[%s8] sm:$0x1]
    %v855 = vlaneseq
    %v856 = vshrl.u32 %v855, 7
    %v857 = vsub.s32 0, %v856
    %v858 = vrot.slane %v853, %v857
    %v892 = vunpack.c.l.b16 %v821
    %v893 = vunpack.c.l.b16 %v822
    %v894 = vunpack.c.l.b16 %v823
    %v895 = vunpack.c.l.b16 %v824
    %v896 = vunpack.c.l.b16 %v825
    %v897 = vunpack.c.l.b16 %v826
    %v898 = vunpack.c.l.b16 %v827
    %v899 = vunpack.c.l.b16 %v828
    %v900 = vunpack.c.l.b16 %v829
    %v901 = vunpack.c.l.b16 %v830
    %v902 = vunpack.c.l.b16 %v831
    %v903 = vunpack.c.l.b16 %v832
    %v904 = vunpack.c.l.b16 %v833
    %v905 = vunpack.c.l.b16 %v834
    %v906 = vunpack.c.l.b16 %v835
    %v907 = vunpack.c.l.b16 %v836
    %v908 = vunpack.c.l.b16 %v837
    %v909 = vunpack.c.l.b16 %v838
    %v910 = vunpack.c.l.b16 %v839
    %v911 = vunpack.c.l.b16 %v840
    %v912 = vunpack.c.l.b16 %v841
    %v913 = vunpack.c.l.b16 %v842
    %v914 = vunpack.c.l.b16 %v843
    %v915 = vunpack.c.l.b16 %v844
    %v916 = vunpack.c.l.b16 %v845
    %v917 = vunpack.c.l.b16 %v846
    %v918 = vunpack.c.l.b16 %v847
    %v919 = vunpack.c.l.b16 %v848
    %v920 = vunpack.c.l.b16 %v849
    %v921 = vunpack.c.l.b16 %v850
    %v922 = vunpack.c.l.b16 %v851
    %v923 = vunpack.c.l.b16 %v852
    %v924 = vpack.c.b16 %v893, %v892
    %v925 = vpack.c.b16 %v895, %v894
    %v926 = vpack.c.b16 %v897, %v896
    %v927 = vpack.c.b16 %v899, %v898
    %v928 = vpack.c.b16 %v901, %v900
    %v929 = vpack.c.b16 %v903, %v902
    %v930 = vpack.c.b16 %v905, %v904
    %v931 = vpack.c.b16 %v907, %v906
    %v932 = vpack.c.b16 %v909, %v908
    %v933 = vpack.c.b16 %v911, %v910
    %v934 = vpack.c.b16 %v913, %v912
    %v935 = vpack.c.b16 %v915, %v914
    %v936 = vpack.c.b16 %v917, %v916
    %v937 = vpack.c.b16 %v919, %v918
    %v938 = vpack.c.b16 %v921, %v920
    %v939 = vpack.c.b16 %v923, %v922
    %956 = vmatprep.subr.bf16.mxu0 0
    %957 = vmatpush1.bf16.msra.mxu0 %v931
    %958 = vmatprep.subr.bf16.mxu0 0
    %959 = vmatpush1.bf16.msra.mxu0 %v930
    %960 = vmatprep.subr.bf16.mxu0 0
    %961 = vmatpush1.bf16.msra.mxu0 %v929
    %962 = vmatprep.subr.bf16.mxu0 0
    %963 = vmatpush1.bf16.msra.mxu0 %v928
    %964 = vmatprep.subr.bf16.mxu0 0
    %965 = vmatpush1.bf16.msra.mxu0 %v927
    %966 = vmatprep.subr.bf16.mxu0 0
    %967 = vmatpush1.bf16.msra.mxu0 %v926
    %968 = vmatprep.subr.bf16.mxu0 0
    %969 = vmatpush1.bf16.msra.mxu0 %v925
    %970 = vmatprep.subr.bf16.mxu0 0
    %971 = vmatpush1.bf16.msra.mxu0 %v924
    %972 = vmatprep.subr.bf16.mxu0 0
    %973 = vmatpush2.bf16.msra.mxu0 %v939
    %974 = vmatprep.subr.bf16.mxu0 0
    %975 = vmatpush2.bf16.msra.mxu0 %v938
    %976 = vmatprep.subr.bf16.mxu0 0
    %977 = vmatpush2.bf16.msra.mxu0 %v937
    %978 = vmatprep.subr.bf16.mxu0 0
    %979 = vmatpush2.bf16.msra.mxu0 %v936
    %980 = vmatprep.subr.bf16.mxu0 0
    %981 = vmatpush2.bf16.msra.mxu0 %v935
    %982 = vmatprep.subr.bf16.mxu0 0
    %983 = vmatpush2.bf16.msra.mxu0 %v934
    %984 = vmatprep.subr.bf16.mxu0 0
    %985 = vmatpush2.bf16.msra.mxu0 %v933
    %986 = vmatprep.subr.bf16.mxu0 0
    %987 = vmatpush2.bf16.msra.mxu0 %v932
    %988 = vmatprep.mubr.bf16.mxu0 %v820
    %989 = vmatmul.mubr.bf16.gmra.mxu0 %v819
    %v990 = vpop.f32.mrf.mxu0
    %v991 = vadd.f32 %v858, %v990
    %v992 = vpop.f32.mrf.mxu0
    %v993 = vpop.f32.mrf.mxu0
    %v994 = vadd.f32 %v858, %v993
    %v995 = vpop.f32.mrf.mxu0
    %996 = vdwg.mxu0
    %997 = vst [vmem:[#allocation11] sm:$0xff] %v991
    %998 = vst [vmem:[#allocation11 + $0x8] sm:$0xff] %v994
    // Predicated region
    $region58: #{tpu_custom_call.1} parent=1 // pred_check
      _
    $region59: #{tpu_custom_call.1} parent=1 // pred_check_branch
      %1000 = sbr.rel (0) target = $region61
    $region60: #{tpu_custom_call.1} parent=1 // pred_region
      %s1002 = ssub.s32 256, 256
      %1003 = vsyncadd [#allocation4], %s1002
      %s1004 = sshll.u32 [#allocation11], 4
      %s1005 = int_to_ptr.vmem [resolvable:$true] %s1004
      %1010 = dma.vmem_to_hbm [thread:$0]  %s1005, 256, %s9, [#allocation4], 128, 128, 8
    $region61: #{tpu_custom_call.1} parent=1 // pred_fallthru
      _
    // Predicated region
    $region62: #{tpu_custom_call.1} parent=1 // pred_check
      _
    $region63: #{tpu_custom_call.1} parent=1 // pred_check_branch
      %1012 = sbr.rel (0) target = $region65
    $region64: #{tpu_custom_call.1} parent=1 // pred_region
      %1013 = dma.done [#allocation4], 256
    $region65: #{tpu_custom_call.1} parent=1 // pred_fallthru
      _
    %1014 = vsyncpa [#allocation3], 1
    %1015 = vsyncpa [#allocation6], 1
    %1016 = vsyncpa [#allocation9], 1
    %1017 = vsyncpa [#allocation4], 1

</llo_original>
